<compile_context>
chip_gen: v5e
topology: v5e:2x2
jax: 0.10.0
libtpu: 0.0.40
codegen_flags: <defaults>
</compile_context>

<pallas_src>
import jax
import jax.numpy as jnp
from jax.experimental import pallas as pl
from jax.experimental.pallas import tpu as pltpu


def _linear_kernel(x_ref, w_ref, b_ref, o_ref):
    # Fused dtype cast (mirrors torch `.to(weight.dtype)`) done in VMEM.
    x = x_ref[...].astype(w_ref.dtype)
    # Canonical [TB, K] x [K, N] MXU feed (weight pre-transposed in wrapper).
    acc = jnp.dot(x, w_ref[...], preferred_element_type=jnp.float32)
    o_ref[...] = (acc + b_ref[...].astype(jnp.float32)).astype(o_ref.dtype)


def _round_up(v, m):
    return (v + m - 1) // m * m


def _pick_block_rows(n_rows, k, n, x_itemsize, w_itemsize, o_itemsize,
                     vmem_budget_bytes=24 * 1024 * 1024,
                     hbm_step_target_bytes=8 * 1024 * 1024):
    """Batch tile (rows of the kernel-visible x) sized so that:
      - the (8,128)-padded, double-buffered x/out tiles + weight + bias fit a
        ~24 MiB VMEM envelope (under the 32 MiB vmem_limit we set),
      - each grid step moves ~8 MiB of real x+out HBM traffic (amortizes the
        ~0.35 us per-step pipeline overhead),
      - the grid has >= 2 steps whenever possible (both v7x TensorCores)."""
    if n_rows <= 8:
        return int(n_rows)  # single full block (block dim == array dim is legal)

    # On-chip footprint uses lane/sublane-padded tiles.
    k_pad = _round_up(k, 128)
    n_pad = _round_up(n, 128)
    fixed = (2 * _round_up(k, 8) * n_pad * w_itemsize   # weight, 2 buffers
             + 2 * 8 * n_pad * o_itemsize)              # bias,   2 buffers
    avail = max(vmem_budget_bytes - fixed, 1 << 20)
    per_row_vmem = 2 * (k_pad * x_itemsize + n_pad * o_itemsize)  # double-buffered
    tb_vmem = avail // per_row_vmem

    # Real HBM bytes per row of streamed traffic (x read + out write).
    per_row_hbm = k * x_itemsize + n * o_itemsize
    tb_hbm = hbm_step_target_bytes // max(per_row_hbm, 1)

    tb = min(tb_vmem, max(tb_hbm, 8))
    # Keep at least 2 grid steps so the parallel axis feeds both v7x cores.
    tb = min(tb, _round_up(pl.cdiv(n_rows, 2), 8))
    tb = max(8, (tb // 8) * 8)
    return int(tb)


def item_encode_forward(x, weight, bias):
    """Pallas equivalent of ItemEncode.forward.

    Args:
      x:      [B, D]  input features (any float dtype; cast inside the kernel
                       to weight dtype, mirroring torch `.to(weight.dtype)`).
      weight: [64, D] nn.Linear weight (NOT pre-transposed by the caller).
      bias:   [64]    nn.Linear bias.
    Returns:
      [B, 64] output in weight dtype.
    """
    B, D = x.shape
    out_dim = weight.shape[0]
    out_dtype = weight.dtype

    wt = weight.T  # [D, 64] one-time tiny transpose -> canonical MXU feed

    # Lane-dense output: pack 2 batch rows per 128-lane output row when B is even.
    packed = (B >= 2) and (B % 2 == 0) and (2 * out_dim == 128)
    if packed:
        n_rows, K, N = B // 2, 2 * D, 2 * out_dim
        x_in = x.reshape(n_rows, K)                      # free row-major view
        zero = jnp.zeros((D, out_dim), dtype=out_dtype)
        w_in = jnp.concatenate(                          # block-diag [2D, 128]
            [jnp.concatenate([wt, zero], axis=1),
             jnp.concatenate([zero, wt], axis=1)], axis=0)
        b_in = jnp.concatenate([bias, bias]).reshape(1, N)
    else:
        n_rows, K, N = B, D, out_dim
        x_in, w_in, b_in = x, wt, bias.reshape(1, out_dim)

    x_itemsize = jnp.dtype(x.dtype).itemsize
    w_itemsize = jnp.dtype(out_dtype).itemsize
    o_itemsize = jnp.dtype(out_dtype).itemsize
    b_itemsize = jnp.dtype(bias.dtype).itemsize

    tb = _pick_block_rows(n_rows, K, N, x_itemsize, w_itemsize, o_itemsize)
    grid = (pl.cdiv(n_rows, tb),)

    cost = pl.CostEstimate(
        flops=2 * n_rows * K * N,
        transcendentals=0,
        bytes_accessed=(n_rows * K * x_itemsize
                        + K * N * w_itemsize
                        + N * b_itemsize
                        + n_rows * N * o_itemsize),
    )

    out = pl.pallas_call(
        _linear_kernel,
        out_shape=jax.ShapeDtypeStruct((n_rows, N), out_dtype),
        grid=grid,
        in_specs=[
            # x streams through VMEM in (tb, K) tiles.
            pl.BlockSpec((tb, K), lambda i: (i, 0)),
            # weight / bias: constant index_map -> loaded once, VMEM-resident.
            pl.BlockSpec((K, N), lambda i: (0, 0)),
            pl.BlockSpec((1, N), lambda i: (0, 0)),
        ],
        out_specs=pl.BlockSpec((tb, N), lambda i: (i, 0)),
        compiler_params=pltpu.CompilerParams(
            dimension_semantics=("parallel",),
            vmem_limit_bytes=32 * 1024 * 1024,
        ),
        cost_estimate=cost,
    )(x_in, w_in, b_in)

    return out.reshape(B, out_dim) if packed else out


if __name__ == "__main__":
    key = jax.random.PRNGKey(0)
    k_x, k_w, k_b = jax.random.split(key, 3)

    batch = 8
    input_dim = 32   # ItemEncode(input_dim)
    out_dim = 64

    # Deterministic synthetic parameters (PyTorch-Linear-style uniform init).
    bound = 1.0 / jnp.sqrt(input_dim)
    weight = jax.random.uniform(k_w, (out_dim, input_dim),
                                minval=-bound, maxval=bound,
                                dtype=jnp.float32)
    bias = jax.random.uniform(k_b, (out_dim,),
                              minval=-bound, maxval=bound,
                              dtype=jnp.float32)

    x = jax.random.normal(k_x, (batch, input_dim), dtype=jnp.float32)

    out = jax.block_until_ready(item_encode_forward(x, weight, bias))

    # Reference check against plain JAX (same math as torch's nn.Linear).
    ref = x.astype(weight.dtype) @ weight.T + bias
    assert out.shape == (batch, out_dim)
    assert jnp.allclose(out, ref, atol=1e-4, rtol=1e-4), \
        float(jnp.max(jnp.abs(out - ref)))

    print("KERNEL_OK")
</pallas_src>

<mosaic_0001>
module attributes {stable_mosaic.version = 11 : i64} {
  func.func @_linear_kernel(%arg0: i32, %arg1: memref<4x64xf32, #tpu.memory_space<vmem>>, %arg2: memref<64x128xf32, #tpu.memory_space<vmem>>, %arg3: memref<1x128xf32, #tpu.memory_space<vmem>>, %arg4: memref<4x128xf32, #tpu.memory_space<vmem>>) attributes {dimension_semantics = [#tpu.dimension_semantics<parallel>], iteration_bounds = array<i64: 1>, scalar_prefetch = 0 : i64, scratch_operands = 0 : i64, tpu.core_type = #tpu.core_type<tc>, window_params = [{transform_indices = @transform_0, window_bounds = array<i64: 4, 64>}, {pipeline_mode = #tpu.pipeline_mode<synchronous>, transform_indices = @transform_1, window_bounds = array<i64: 64, 128>}, {pipeline_mode = #tpu.pipeline_mode<synchronous>, transform_indices = @transform_2, window_bounds = array<i64: 1, 128>}, {transform_indices = @transform_3, window_bounds = array<i64: 4, 128>}]} {
    %c0 = arith.constant 0 : index
    %c0_0 = arith.constant 0 : index
    %0 = vector.load %arg1[%c0, %c0_0] : memref<4x64xf32, #tpu.memory_space<vmem>>, vector<4x64xf32>
    %c0_1 = arith.constant 0 : index
    %c0_2 = arith.constant 0 : index
    %1 = vector.load %arg2[%c0_1, %c0_2] : memref<64x128xf32, #tpu.memory_space<vmem>>, vector<64x128xf32>
    %cst = arith.constant dense<0.000000e+00> : vector<4x128xf32>
    %2 = tpu.matmul %0, %1, %cst {dimension_numbers = #tpu.dot_dimension_numbers<[1], [0], [0], [1], [0, 0, 1, 1], [], []>} : vector<4x64xf32>, vector<64x128xf32>, vector<4x128xf32> -> vector<4x128xf32>
    %c0_3 = arith.constant 0 : index
    %c0_4 = arith.constant 0 : index
    %3 = vector.load %arg3[%c0_3, %c0_4] : memref<1x128xf32, #tpu.memory_space<vmem>>, vector<1x128xf32>
    %4 = vector.broadcast %3 : vector<1x128xf32> to vector<4x128xf32>
    %5 = arith.addf %2, %4 : vector<4x128xf32>
    %c0_5 = arith.constant 0 : index
    %c0_6 = arith.constant 0 : index
    %6 = vector.load %arg4[%c0_5, %c0_6] : memref<4x128xf32, #tpu.memory_space<vmem>>, vector<4x128xf32>
    tpu.vector_store %arg4[%c0_5, %c0_6], %5 {strides = array<i32>} : memref<4x128xf32, #tpu.memory_space<vmem>>, vector<4x128xf32>,
    return
  }
  func.func @transform_0(%arg0: i32) -> (i32, i32) {
    %c0_i32 = arith.constant 0 : i32
    %c0_i32_0 = arith.constant 0 : i32
    return %arg0, %c0_i32 : i32, i32
  }
  func.func @transform_1(%arg0: i32) -> (i32, i32) {
    %c0_i32 = arith.constant 0 : i32
    %c0_i32_0 = arith.constant 0 : i32
    %c0_i32_1 = arith.constant 0 : i32
    return %c0_i32, %c0_i32_0 : i32, i32
  }
  func.func @transform_2(%arg0: i32) -> (i32, i32) {
    %c0_i32 = arith.constant 0 : i32
    %c0_i32_0 = arith.constant 0 : i32
    %c0_i32_1 = arith.constant 0 : i32
    return %c0_i32, %c0_i32_0 : i32, i32
  }
  func.func @transform_3(%arg0: i32) -> (i32, i32) {
    %c0_i32 = arith.constant 0 : i32
    %c0_i32_0 = arith.constant 0 : i32
    return %arg0, %c0_i32 : i32, i32
  }
}

</mosaic_0001>

<llo_original>
// kernel: tpu_custom_call.1
$region0: #{tpu_custom_call.1}
  #allocation0 [shape = 'u32[]', space=smem, size = 0x4, offset = 0x4, fixed_abs, tag = 'smem constant byte address 0x4 - core index']
  #allocation1 [shape = 'u32[72,128]{1,0:T(1,128)}', space=vmem, size = 0x9000, scoped, tag = 'internal scratch']
  %s0 = inlined_call_operand.hbm [shape: f32[4,64], index: 0, kind: input, shape index: {}]
  %s1 = inlined_call_operand.hbm [shape: f32[64,128], index: 1, kind: input, shape index: {}]
  %s2 = inlined_call_operand.vmem [shape: f32[1,128], index: 2, kind: input, shape index: {}]
  %s3 = inlined_call_operand.hbm [shape: f32[4,128], index: 3, kind: output, shape index: {}]
  %s4 = sld [smem:[#allocation0]]
  $region30: #{tpu_custom_call.1} parent=0
    _
  %s6 = ssub.s32 1, %s4
  %s7 = scalar_select 0, %s6, %s4
  $region1: #{tpu_custom_call.1} parent=0
    #allocation2 [shape = 'u8[2048]{0}', space=vmem, size = 0x800, scoped, tag = 'input window, operand 0, single buffered']
    #allocation3 [shape = 's32[1]{0}', space=sflag, size = 0x4, scoped, tag = 'scoped memory for tpu_custom_call.1']
    #allocation4 [shape = 's32[1]{0}', space=sflag, size = 0x4, scoped, tag = 'scoped memory for tpu_custom_call.1']
    #allocation5 [shape = 'u8[32768]{0}', space=vmem, size = 0x8000, scoped, tag = 'input window, operand 1, single buffered']
    #allocation6 [shape = 's32[1]{0}', space=sflag, size = 0x4, scoped, tag = 'scoped memory for tpu_custom_call.1']
    #allocation7 [shape = 'u8[2048]{0}', space=vmem, size = 0x800, scoped, tag = 'output window, operand 0, single buffered']
    %8 = vsyncpa [#allocation3], 0
    %9 = vsyncpa [#allocation6], 0
    %10 = vsyncpa [#allocation4], 0
    // Predicated region
    $region2: #{tpu_custom_call.1} parent=1 // pred_check
      _
    $region3: #{tpu_custom_call.1} parent=1 // pred_check_branch
      %12 = sbr.rel (0) target = $region5
    $region4: #{tpu_custom_call.1} parent=1 // pred_region
      %14 = vsyncadd [#allocation3], 0
      %s16 = sshll.u32 %s0, 4
      %s17 = int_to_ptr.hbm [resolvable:$true] %s16
      %s18 = sshll.u32 [#allocation2], 4
      %s19 = int_to_ptr.vmem [resolvable:$true] %s18
      %21 = dma.hbm_to_vmem [thread:$0]  %s17, 64, %s19, [#allocation3]
    $region5: #{tpu_custom_call.1} parent=1 // pred_fallthru
      _
    // Predicated region
    $region6: #{tpu_custom_call.1} parent=1 // pred_check
      _
    $region7: #{tpu_custom_call.1} parent=1 // pred_check_branch
      %23 = sbr.rel (0) target = $region9
    $region8: #{tpu_custom_call.1} parent=1 // pred_region
      %25 = vsyncadd [#allocation6], 0
      %s26 = sshll.u32 %s1, 4
      %s27 = int_to_ptr.hbm [resolvable:$true] %s26
      %s28 = sshll.u32 [#allocation5], 4
      %s29 = int_to_ptr.vmem [resolvable:$true] %s28
      %34 = dma.hbm_to_vmem [thread:$0]  %s27, 1024, %s29, [#allocation6], 128, 128, 8
    $region9: #{tpu_custom_call.1} parent=1 // pred_fallthru
      _
    // Predicated region
    $region10: #{tpu_custom_call.1} parent=1 // pred_check
      _
    $region11: #{tpu_custom_call.1} parent=1 // pred_check_branch
      %36 = sbr.rel (0) target = $region13
    $region12: #{tpu_custom_call.1} parent=1 // pred_region
      _
    $region13: #{tpu_custom_call.1} parent=1 // pred_fallthru
      _
    // Predicated region
    $region14: #{tpu_custom_call.1} parent=1 // pred_check
      _
    $region15: #{tpu_custom_call.1} parent=1 // pred_check_branch
      %38 = sbr.rel (0) target = $region17
    $region16: #{tpu_custom_call.1} parent=1 // pred_region
      %40 = dma.done [#allocation3], 64
    $region17: #{tpu_custom_call.1} parent=1 // pred_fallthru
      _
    // Predicated region
    $region18: #{tpu_custom_call.1} parent=1 // pred_check
      _
    $region19: #{tpu_custom_call.1} parent=1 // pred_check_branch
      %42 = sbr.rel (0) target = $region21
    $region20: #{tpu_custom_call.1} parent=1 // pred_region
      %44 = dma.done [#allocation6], 1024
    $region21: #{tpu_custom_call.1} parent=1 // pred_fallthru
      _
    %v45 = vld [vmem:[#allocation2] sm:$0xf]
    %v46 = vld [vmem:[#allocation5] sm:$0xff]
    %v47 = vld [vmem:[#allocation5 + $0x8] sm:$0xff]
    %v48 = vld [vmem:[#allocation5 + $0x10] sm:$0xff]
    %v49 = vld [vmem:[#allocation5 + $0x18] sm:$0xff]
    %v50 = vld [vmem:[#allocation5 + $0x20] sm:$0xff]
    %v51 = vld [vmem:[#allocation5 + $0x28] sm:$0xff]
    %v52 = vld [vmem:[#allocation5 + $0x30] sm:$0xff]
    %v53 = vld [vmem:[#allocation5 + $0x38] sm:$0xff]
    %v54 = vld [vmem:[%s2] sm:$0x1]
    %v56 = vperm.slane %v54, 0
    %vm58 = vcmask 523264
    %v60 = vsel %vm58, %v45, 0
    %62 = vmatpush.msra.mxu0 0.0
    %63 = vmatpush.msra.mxu0 0.0
    %64 = vmatpush.msra.mxu0 0.0
    %65 = vmatpush.msra.mxu0 0.0
    %66 = vmatpush.msra.mxu0 0.0
    %67 = vmatpush.msra.mxu0 0.0
    %68 = vmatpush.msra.mxu0 0.0
    %69 = vmatpush.msra.mxu0 0.0
    %70 = vmatpush.msra.mxu0 %v53
    %71 = vmatpush.msra.mxu0 %v52
    %72 = vmatpush.msra.mxu0 %v51
    %73 = vmatpush.msra.mxu0 %v50
    %74 = vmatpush.msra.mxu0 %v49
    %75 = vmatpush.msra.mxu0 %v48
    %76 = vmatpush.msra.mxu0 %v47
    %77 = vmatpush.msra.mxu0 %v46
    %78 = vmatmul.f32.gmra.mxu0 %v60
    %v79 = vpop.f32.mrf.mxu0
    %v80 = vadd.f32 %v56, %v79
    %81 = vdwg.mxu0
    %82 = vst [vmem:[#allocation7] sm:$0xf] %v80
    // Predicated region
    $region22: #{tpu_custom_call.1} parent=1 // pred_check
      _
    $region23: #{tpu_custom_call.1} parent=1 // pred_check_branch
      %84 = sbr.rel (0) target = $region25
    $region24: #{tpu_custom_call.1} parent=1 // pred_region
      %86 = vsyncadd [#allocation4], 0
      %s88 = sshll.u32 [#allocation7], 4
      %s89 = int_to_ptr.vmem [resolvable:$true] %s88
      %s90 = sshll.u32 %s3, 4
      %s91 = int_to_ptr.hbm [resolvable:$true] %s90
      %93 = dma.vmem_to_hbm [thread:$0]  %s89, 64, %s91, [#allocation4]
    $region25: #{tpu_custom_call.1} parent=1 // pred_fallthru
      _
    // Predicated region
    $region26: #{tpu_custom_call.1} parent=1 // pred_check
      _
    $region27: #{tpu_custom_call.1} parent=1 // pred_check_branch
      %95 = sbr.rel (0) target = $region29
    $region28: #{tpu_custom_call.1} parent=1 // pred_region
      %97 = dma.done [#allocation4], 64
    $region29: #{tpu_custom_call.1} parent=1 // pred_fallthru
      _
    %98 = vsyncpa [#allocation3], 1
    %99 = vsyncpa [#allocation6], 1
    %100 = vsyncpa [#allocation4], 1

</llo_original>
